<compile_context>
chip_gen: v7x
topology: tpu7x:2x2x1
jax: 0.10.0
libtpu: 0.0.40
codegen_flags: <defaults>
</compile_context>

<pallas_src>
import math

import jax
import jax.numpy as jnp
from jax.experimental import pallas as pl
from jax.experimental.pallas import tpu as pltpu

TWO_PI = 2.0 * math.pi
RAD_THRESH = 5.0 * (math.pi / 180.0)
PX_THRESH = 5.0
DEG_PER_RAD = 180.0 / math.pi
_OUT_LANES = 128
_OUT_ROWS = 8            # one aligned (8, 128) partial-sum block per core


def _cdiv(a, b):
    return -(-a // b)


def _round_up(x, m):
    return ((x + m - 1) // m) * m


def _make_partial_sum_kernel(batch, tile_b, tiles_per_core, num_cores):
    """Kernel producing per-core partial sums [rot_sum, center_sum, ok_count]."""
    num_full = batch // tile_b                  # tiles with no ragged rows
    total_blocks = num_cores * tiles_per_core   # tiles covered by the grid

    def kernel(gt_ref, pr_ref, out_ref):
        i = pl.program_id(1)                    # batch-tile axis ("arbitrary")

        @pl.when(i == 0)
        def _init():
            out_ref[...] = jnp.zeros_like(out_ref)

        gt = gt_ref[...].astype(jnp.float32)    # (tile_b, D)
        pr = pr_ref[...].astype(jnp.float32)
        tb, d = gt.shape

        # feature lanes: 0..2 are euler angles, 3..D-1 are center coords
        feat = jax.lax.broadcasted_iota(jnp.int32, (1, d), 1)
        is_angle = feat < 3

        diff = pr - gt
        ad = jnp.abs(diff)
        # min(|d|, |d + 2pi|, |d - 2pi|) == min(|d|, ||d| - 2pi|)
        dmin = jnp.minimum(ad, jnp.abs(ad - TWO_PI))

        rot_ps = jnp.sum(jnp.where(is_angle, dmin, 0.0), axis=1,
                         keepdims=True) * (1.0 / 3.0)                  # (tb, 1)
        c2_ps = jnp.sum(jnp.where(is_angle, 0.0, diff * diff), axis=1,
                        keepdims=True)                                  # (tb, 1)
        center_ps = jnp.sqrt(c2_ps)                                     # (tb, 1)
        ok_ps = (center_ps < PX_THRESH).astype(jnp.float32)             # (tb, 1)

        lane = jax.lax.broadcasted_iota(jnp.int32, (1, _OUT_LANES), 1)
        zeros = jnp.zeros((1, _OUT_LANES), jnp.float32)

        def _accumulate(rp, cp, op):
            rs = jnp.sum(rp, axis=0, keepdims=True)        # (1, 1) tile sums
            cs = jnp.sum(cp, axis=0, keepdims=True)
            ks = jnp.sum(op, axis=0, keepdims=True)
            packed = (jnp.where(lane == 0, rs, zeros)
                      + jnp.where(lane == 1, cs, zeros)
                      + jnp.where(lane == 2, ks, zeros))
            out_ref[0:1, :] += packed

        if num_full == total_blocks:
            # every covered tile lies completely inside the batch: no masking
            _accumulate(rot_ps, center_ps, ok_ps)
        else:
            c = pl.program_id(0)
            g = c * tiles_per_core + i                     # global tile index

            @pl.when(g < num_full)
            def _full_tile():
                _accumulate(rot_ps, center_ps, ok_ps)

            @pl.when(g >= num_full)
            def _ragged_tile():
                # rows beyond the batch hold unspecified data -> jnp.where
                # masking (NaN/Inf safe) against a static-int remainder.
                limit = batch - g * tile_b                 # may be <= 0
                row = jax.lax.broadcasted_iota(jnp.int32, (tb, 1), 0)
                valid = row < limit
                _accumulate(jnp.where(valid, rot_ps, 0.0),
                            jnp.where(valid, center_ps, 0.0),
                            jnp.where(valid, ok_ps, 0.0))

    return kernel


def euler_angle_pose_loss(labels_gt, preds, w_rot=1.0, w_center=1.0,
                          block_b=4096, num_cores=2):
    """Pallas TPU implementation of EulerAnglePoseLoss.forward (forward only).

    labels_gt / preds: (B, D), D = 3 euler angles + (D - 3) center coords.
    Any float dtype is accepted (bf16 halves HBM traffic); math runs in f32.
    """
    assert labels_gt.shape == preds.shape and labels_gt.ndim == 2
    B, D = labels_gt.shape
    assert D >= 3, "expected 3 euler angles followed by center coordinates"

    # batch tile: multiple of 8 sublanes; default keeps the double-buffered,
    # lane-padded VMEM footprint (~ 4 * tile_b * 512 B for f32) inside every
    # generation's default scoped VMEM budget (16 MiB on v5e).
    tile_b = int(min(block_b, _round_up(B, 8)))
    tile_b = max(8, (tile_b // 8) * 8)
    num_tiles = _cdiv(B, tile_b)
    nc = max(1, min(num_cores, num_tiles))   # megacore split on v7x; loop elsewhere
    tpc = _cdiv(num_tiles, nc)

    kernel = _make_partial_sum_kernel(B, tile_b, tpc, nc)

    if nc * tpc == num_tiles:
        def in_map(c, i):
            return (c * tpc + i, 0)
    else:
        last = num_tiles - 1

        def in_map(c, i):
            # grid covers a few extra (fully masked-out) tiles when the tile
            # count does not split evenly across cores; clamp the DMA source.
            return (jnp.minimum(c * tpc + i, last), 0)

    in_spec = pl.BlockSpec((tile_b, D), in_map)
    out_spec = pl.BlockSpec((_OUT_ROWS, _OUT_LANES), lambda c, i: (c, 0))

    itemsize = jnp.dtype(labels_gt.dtype).itemsize
    cost = pl.CostEstimate(
        flops=int(10 * B * D),
        transcendentals=int(B),
        bytes_accessed=int(2 * B * D * itemsize
                           + nc * _OUT_ROWS * _OUT_LANES * 4),
    )

    partials = pl.pallas_call(
        kernel,
        out_shape=jax.ShapeDtypeStruct((nc * _OUT_ROWS, _OUT_LANES), jnp.float32),
        grid_spec=pltpu.PrefetchScalarGridSpec(
            num_scalar_prefetch=0,
            grid=(nc, tpc),
            in_specs=[in_spec, in_spec],
            out_specs=out_spec,
        ),
        compiler_params=pltpu.CompilerParams(
            dimension_semantics=("parallel", "arbitrary")),
        cost_estimate=cost,
    )(labels_gt, preds)

    # combine per-core partial sums and finalize with a few scalar ops
    sums = jnp.sum(partials, axis=0)             # (_OUT_LANES,)
    inv_b = 1.0 / B
    rot_loss = sums[0] * inv_b
    center_loss = sums[1] * inv_b
    ok_frac = sums[2] * inv_b

    total_loss = w_rot * rot_loss + w_center * center_loss
    rot_deg_mean = rot_loss * DEG_PER_RAD
    # reference gates every sample on the batch-mean rotation loss
    acc_5 = jnp.where(rot_loss < RAD_THRESH, ok_frac, jnp.zeros_like(ok_frac))

    metrics = {
        'total_loss': total_loss,
        'rot_loss': rot_loss,
        'center_loss': center_loss,
        'rot_deg_mean': rot_deg_mean,
        'center_px_mean': center_loss,
        'acc_5deg_5px': acc_5,
    }
    return total_loss, metrics


def _reference(labels_gt, preds, w_rot=1.0, w_center=1.0):
    """Pure-JAX reference mirroring the PyTorch module exactly."""
    labels_gt = labels_gt.astype(jnp.float32)
    preds = preds.astype(jnp.float32)
    ang_gt, ang_pr = labels_gt[:, :3], preds[:, :3]
    d1 = jnp.abs(ang_pr - ang_gt)
    d2 = jnp.abs(ang_pr + TWO_PI - ang_gt)
    d3 = jnp.abs(ang_pr - TWO_PI - ang_gt)
    dmin = jnp.minimum(jnp.minimum(d1, d2), d3)
    rot_loss = jnp.mean(jnp.mean(dmin, axis=1))
    center_dist = jnp.linalg.norm(labels_gt[:, 3:] - preds[:, 3:], axis=1)
    center_loss = jnp.mean(center_dist)
    total = w_rot * rot_loss + w_center * center_loss
    acc = jnp.mean(((rot_loss < RAD_THRESH) & (center_dist < PX_THRESH))
                   .astype(jnp.float32))
    return total, rot_loss, center_loss, rot_loss * DEG_PER_RAD, center_loss, acc


def _make_inputs(key, B, n_center, dtype=jnp.float32):
    k1, k2, k3, k4 = jax.random.split(key, 4)
    angles_gt = jax.random.uniform(k1, (B, 3), minval=-math.pi, maxval=math.pi)
    angles_pr = angles_gt + 0.1 * jax.random.normal(k2, (B, 3))
    center_gt = jax.random.uniform(k3, (B, n_center), minval=0.0, maxval=32.0)
    center_pr = center_gt + 2.0 * jax.random.normal(k4, (B, n_center))
    labels_gt = jnp.concatenate([angles_gt, center_gt], axis=1).astype(dtype)
    preds = jnp.concatenate([angles_pr, center_pr], axis=1).astype(dtype)
    return labels_gt, preds


def _check(labels_gt, preds, w_rot, w_center, block_b, atol=1e-5, rtol=1e-5):
    total_loss, metrics = euler_angle_pose_loss(
        labels_gt, preds, w_rot=w_rot, w_center=w_center, block_b=block_b)
    jax.block_until_ready(total_loss)
    jax.block_until_ready(metrics)
    ref = _reference(labels_gt, preds, w_rot, w_center)
    got = (total_loss, metrics['rot_loss'], metrics['center_loss'],
           metrics['rot_deg_mean'], metrics['center_px_mean'],
           metrics['acc_5deg_5px'])
    for g, r in zip(got, ref):
        assert jnp.allclose(g, r, atol=atol, rtol=rtol), (g, r)


if __name__ == "__main__":
    key = jax.random.PRNGKey(0)
    k_small, k_big, k_bf16 = jax.random.split(key, 3)

    # small case: B=8, 3 euler angles + 2D pixel center (single tile, 1 core)
    labels_gt, preds = _make_inputs(k_small, B=8, n_center=2)
    _check(labels_gt, preds, w_rot=1.0, w_center=1.0, block_b=4096)

    # multi-tile / both-core path: exercises accumulation, the ragged last
    # tile, and the fully-masked extra tile from the uneven 2-core split.
    labels_gt2, preds2 = _make_inputs(k_big, B=300, n_center=3)
    _check(labels_gt2, preds2, w_rot=0.7, w_center=1.3, block_b=128)

    # narrow-dtype inputs (halves HBM read bytes); kernel upcasts to f32.
    labels_gt3, preds3 = _make_inputs(k_bf16, B=64, n_center=2,
                                      dtype=jnp.bfloat16)
    _check(labels_gt3, preds3, w_rot=1.0, w_center=1.0, block_b=4096,
           atol=1e-4, rtol=1e-4)

    print("KERNEL_OK")
</pallas_src>

<mosaic_0001>
module attributes {stable_mosaic.version = 11 : i64} {
  func.func @kernel(%arg0: i32, %arg1: i32, %arg2: memref<8x5xf32, #tpu.memory_space<vmem>>, %arg3: memref<8x5xf32, #tpu.memory_space<vmem>>, %arg4: memref<8x128xf32, #tpu.memory_space<vmem>>) attributes {dimension_semantics = [#tpu.dimension_semantics<parallel>, #tpu.dimension_semantics<arbitrary>], iteration_bounds = array<i64: 1, 1>, scalar_prefetch = 0 : i64, scratch_operands = 0 : i64, tpu.core_type = #tpu.core_type<tc>, window_params = [{transform_indices = @transform_0, window_bounds = array<i64: 8, 5>}, {transform_indices = @transform_1, window_bounds = array<i64: 8, 5>}, {transform_indices = @transform_2, window_bounds = array<i64: 8, 128>}]} {
    %c0_i32 = arith.constant 0 : i32
    %0 = arith.cmpi eq, %arg1, %c0_i32 : i32
    %1 = arith.extui %0 : i1 to i32
    %c0_i32_0 = arith.constant 0 : i32
    %2 = arith.cmpi ne, %1, %c0_i32_0 : i32
    scf.if %2 {
      %cst_19 = arith.constant 0.000000e+00 : f32
      %62 = vector.broadcast %cst_19 : f32 to vector<8x128xf32>
      %c0_20 = arith.constant 0 : index
      %c0_21 = arith.constant 0 : index
      %63 = vector.load %arg4[%c0_20, %c0_21] : memref<8x128xf32, #tpu.memory_space<vmem>>, vector<8x128xf32>
      tpu.vector_store %arg4[%c0_20, %c0_21], %62 {strides = array<i32>} : memref<8x128xf32, #tpu.memory_space<vmem>>, vector<8x128xf32>,
    } else {
    }
    %c0 = arith.constant 0 : index
    %c0_1 = arith.constant 0 : index
    %3 = vector.load %arg2[%c0, %c0_1] : memref<8x5xf32, #tpu.memory_space<vmem>>, vector<8x5xf32>
    %c0_2 = arith.constant 0 : index
    %c0_3 = arith.constant 0 : index
    %4 = vector.load %arg3[%c0_2, %c0_3] : memref<8x5xf32, #tpu.memory_space<vmem>>, vector<8x5xf32>
    %5 = tpu.iota {dimensions = array<i32: 1>} : vector<1x5xi32>
    %c3_i32 = arith.constant 3 : i32
    %6 = vector.broadcast %c3_i32 : i32 to vector<1x5xi32>
    %7 = arith.cmpi slt, %5, %6 : vector<1x5xi32>
    %8 = arith.subf %4, %3 : vector<8x5xf32>
    %9 = math.absf %8 : vector<8x5xf32>
    %cst = arith.constant 6.28318548 : f32
    %10 = vector.broadcast %cst : f32 to vector<8x5xf32>
    %11 = arith.subf %9, %10 : vector<8x5xf32>
    %12 = math.absf %11 : vector<8x5xf32>
    %13 = arith.minimumf %9, %12 : vector<8x5xf32>
    %cst_4 = arith.constant 0.000000e+00 : f32
    %14 = vector.shape_cast %7 : vector<1x5xi1> to vector<1x5xi1>
    %15 = vector.broadcast %14 : vector<1x5xi1> to vector<8x5xi1>
    %16 = vector.broadcast %cst_4 : f32 to vector<8x5xf32>
    %17 = arith.select %15, %13, %16 : vector<8x5xi1>, vector<8x5xf32>
    %cst_5 = arith.constant dense<0.000000e+00> : vector<8xf32>
    %18 = vector.multi_reduction <add>, %17, %cst_5 [1] : vector<8x5xf32> to vector<8xf32>
    %19 = vector.shape_cast %18 : vector<8xf32> to vector<8x1xf32>
    %cst_6 = arith.constant 0.333333343 : f32
    %20 = vector.broadcast %cst_6 : f32 to vector<8x1xf32>
    %21 = arith.mulf %19, %20 : vector<8x1xf32>
    %22 = arith.mulf %8, %8 : vector<8x5xf32>
    %cst_7 = arith.constant 0.000000e+00 : f32
    %23 = vector.shape_cast %7 : vector<1x5xi1> to vector<1x5xi1>
    %24 = vector.broadcast %23 : vector<1x5xi1> to vector<8x5xi1>
    %25 = vector.broadcast %cst_7 : f32 to vector<8x5xf32>
    %26 = arith.select %24, %25, %22 : vector<8x5xi1>, vector<8x5xf32>
    %cst_8 = arith.constant dense<0.000000e+00> : vector<8xf32>
    %27 = vector.multi_reduction <add>, %26, %cst_8 [1] : vector<8x5xf32> to vector<8xf32>
    %28 = vector.shape_cast %27 : vector<8xf32> to vector<8x1xf32>
    %29 = math.sqrt %28 : vector<8x1xf32>
    %cst_9 = arith.constant 5.000000e+00 : f32
    %30 = vector.broadcast %cst_9 : f32 to vector<8x1xf32>
    %31 = arith.cmpf olt, %29, %30 : vector<8x1xf32>
    %32 = arith.extui %31 : vector<8x1xi1> to vector<8x1xi32>
    %33 = arith.sitofp %32 : vector<8x1xi32> to vector<8x1xf32>
    %34 = tpu.iota {dimensions = array<i32: 1>} : vector<1x128xi32>
    %cst_10 = arith.constant 0.000000e+00 : f32
    %35 = vector.broadcast %cst_10 : f32 to vector<1x128xf32>
    %cst_11 = arith.constant dense<0.000000e+00> : vector<1xf32>
    %36 = vector.multi_reduction <add>, %21, %cst_11 [0] : vector<8x1xf32> to vector<1xf32>
    %37 = vector.shape_cast %36 : vector<1xf32> to vector<1x1xf32>
    %cst_12 = arith.constant dense<0.000000e+00> : vector<1xf32>
    %38 = vector.multi_reduction <add>, %29, %cst_12 [0] : vector<8x1xf32> to vector<1xf32>
    %39 = vector.shape_cast %38 : vector<1xf32> to vector<1x1xf32>
    %cst_13 = arith.constant dense<0.000000e+00> : vector<1xf32>
    %40 = vector.multi_reduction <add>, %33, %cst_13 [0] : vector<8x1xf32> to vector<1xf32>
    %41 = vector.shape_cast %40 : vector<1xf32> to vector<1x1xf32>
    %c0_i32_14 = arith.constant 0 : i32
    %42 = vector.broadcast %c0_i32_14 : i32 to vector<1x128xi32>
    %43 = arith.cmpi eq, %34, %42 : vector<1x128xi32>
    %44 = vector.shape_cast %37 : vector<1x1xf32> to vector<1x1xf32>
    %45 = vector.broadcast %44 : vector<1x1xf32> to vector<1x128xf32>
    %46 = arith.select %43, %45, %35 : vector<1x128xi1>, vector<1x128xf32>
    %c1_i32 = arith.constant 1 : i32
    %47 = vector.broadcast %c1_i32 : i32 to vector<1x128xi32>
    %48 = arith.cmpi eq, %34, %47 : vector<1x128xi32>
    %49 = vector.shape_cast %39 : vector<1x1xf32> to vector<1x1xf32>
    %50 = vector.broadcast %49 : vector<1x1xf32> to vector<1x128xf32>
    %51 = arith.select %48, %50, %35 : vector<1x128xi1>, vector<1x128xf32>
    %52 = arith.addf %46, %51 : vector<1x128xf32>
    %c2_i32 = arith.constant 2 : i32
    %53 = vector.broadcast %c2_i32 : i32 to vector<1x128xi32>
    %54 = arith.cmpi eq, %34, %53 : vector<1x128xi32>
    %55 = vector.shape_cast %41 : vector<1x1xf32> to vector<1x1xf32>
    %56 = vector.broadcast %55 : vector<1x1xf32> to vector<1x128xf32>
    %57 = arith.select %54, %56, %35 : vector<1x128xi1>, vector<1x128xf32>
    %58 = arith.addf %52, %57 : vector<1x128xf32>
    %c0_15 = arith.constant 0 : index
    %c0_16 = arith.constant 0 : index
    %59 = vector.load %arg4[%c0_15, %c0_16] : memref<8x128xf32, #tpu.memory_space<vmem>>, vector<1x128xf32>
    %60 = arith.addf %59, %58 : vector<1x128xf32>
    %c0_17 = arith.constant 0 : index
    %c0_18 = arith.constant 0 : index
    %61 = vector.load %arg4[%c0_17, %c0_18] : memref<8x128xf32, #tpu.memory_space<vmem>>, vector<1x128xf32>
    tpu.vector_store %arg4[%c0_17, %c0_18], %60 {strides = array<i32>} : memref<8x128xf32, #tpu.memory_space<vmem>>, vector<1x128xf32>,
    return
  }
  func.func @transform_0(%arg0: i32, %arg1: i32) -> (i32, i32) {
    %c1_i32 = arith.constant 1 : i32
    %0 = arith.muli %arg0, %c1_i32 : i32
    %1 = arith.addi %0, %arg1 : i32
    %c0_i32 = arith.constant 0 : i32
    %c0_i32_0 = arith.constant 0 : i32
    return %1, %c0_i32 : i32, i32
  }
  func.func @transform_1(%arg0: i32, %arg1: i32) -> (i32, i32) {
    %c1_i32 = arith.constant 1 : i32
    %0 = arith.muli %arg0, %c1_i32 : i32
    %1 = arith.addi %0, %arg1 : i32
    %c0_i32 = arith.constant 0 : i32
    %c0_i32_0 = arith.constant 0 : i32
    return %1, %c0_i32 : i32, i32
  }
  func.func @transform_2(%arg0: i32, %arg1: i32) -> (i32, i32) {
    %c0_i32 = arith.constant 0 : i32
    %c0_i32_0 = arith.constant 0 : i32
    return %arg0, %c0_i32 : i32, i32
  }
}

</mosaic_0001>

<llo_original>
// kernel: tpu_custom_call.1
$region0: #{tpu_custom_call.1}
  #allocation0 [shape = 'u32[]', space=smem, size = 0x4, offset = 0x4, fixed_abs, tag = 'smem constant byte address 0x4 - core index']
  #allocation1 [shape = 'u32[144,128]{1,0:T(1,128)}', space=vmem, size = 0x12000, scoped, tag = 'internal scratch']
  %s0 = inlined_call_operand.hbm [shape: f32[8,5], index: 0, kind: input, shape index: {}]
  %s1 = inlined_call_operand.hbm [shape: f32[8,5], index: 1, kind: input, shape index: {}]
  %s2 = inlined_call_operand.hbm [shape: f32[8,128], index: 2, kind: output, shape index: {}]
  %s3 = sld [smem:[#allocation0]]
  $region30: #{tpu_custom_call.1} parent=0
    _
  %s5 = ssub.s32 1, %s3
  %s6 = scalar_select 0, %s5, %s3
  $region1: #{tpu_custom_call.1} parent=0
    #allocation2 [shape = 'u8[4096]{0}', space=vmem, size = 0x1000, scoped, tag = 'input window, operand 0, single buffered']
    #allocation3 [shape = 's32[1]{0}', space=sflag, size = 0x4, scoped, tag = 'scoped memory for tpu_custom_call.1']
    #allocation4 [shape = 's32[1]{0}', space=sflag, size = 0x4, scoped, tag = 'scoped memory for tpu_custom_call.1']
    #allocation5 [shape = 'u8[4096]{0}', space=vmem, size = 0x1000, scoped, tag = 'input window, operand 1, single buffered']
    #allocation6 [shape = 's32[1]{0}', space=sflag, size = 0x4, scoped, tag = 'scoped memory for tpu_custom_call.1']
    #allocation7 [shape = 'u8[4096]{0}', space=vmem, size = 0x1000, scoped, tag = 'output window, operand 0, single buffered']
    %7 = vsyncpa [#allocation3], 0
    %8 = vsyncpa [#allocation6], 0
    %9 = vsyncpa [#allocation4], 0
    // Predicated region
    $region2: #{tpu_custom_call.1} parent=1 // pred_check
      _
    $region3: #{tpu_custom_call.1} parent=1 // pred_check_branch
      %11 = sbr.rel (0) target = $region5
    $region4: #{tpu_custom_call.1} parent=1 // pred_region
      %s12 = sadd.s32 0, 0
      %s14 = ssub.s32 128, 128
      %15 = vsyncadd [#allocation3], %s14
      %s16 = smul.addr %s12, 128
      %s17 = scalar_lea.hbm %s0, %s16
      %s19 = sshll.u32 [#allocation2], 4
      %s20 = int_to_ptr.vmem [resolvable:$true] %s19
      %22 = dma.hbm_to_vmem [thread:$0]  %s17, 128, %s20, [#allocation3]
    $region5: #{tpu_custom_call.1} parent=1 // pred_fallthru
      _
    // Predicated region
    $region6: #{tpu_custom_call.1} parent=1 // pred_check
      _
    $region7: #{tpu_custom_call.1} parent=1 // pred_check_branch
      %24 = sbr.rel (0) target = $region9
    $region8: #{tpu_custom_call.1} parent=1 // pred_region
      %s25 = sadd.s32 0, 0
      %s27 = ssub.s32 128, 128
      %28 = vsyncadd [#allocation6], %s27
      %s29 = smul.addr %s25, 128
      %s30 = scalar_lea.hbm %s1, %s29
      %s32 = sshll.u32 [#allocation5], 4
      %s33 = int_to_ptr.vmem [resolvable:$true] %s32
      %35 = dma.hbm_to_vmem [thread:$0]  %s30, 128, %s33, [#allocation6]
    $region9: #{tpu_custom_call.1} parent=1 // pred_fallthru
      _
    // Predicated region
    $region10: #{tpu_custom_call.1} parent=1 // pred_check
      _
    $region11: #{tpu_custom_call.1} parent=1 // pred_check_branch
      %37 = sbr.rel (0) target = $region13
    $region12: #{tpu_custom_call.1} parent=1 // pred_region
      %38 = dma.done [#allocation3], 128
    $region13: #{tpu_custom_call.1} parent=1 // pred_fallthru
      _
    // Predicated region
    $region14: #{tpu_custom_call.1} parent=1 // pred_check
      _
    $region15: #{tpu_custom_call.1} parent=1 // pred_check_branch
      %40 = sbr.rel (0) target = $region17
    $region16: #{tpu_custom_call.1} parent=1 // pred_region
      %41 = dma.done [#allocation6], 128
    $region17: #{tpu_custom_call.1} parent=1 // pred_fallthru
      _
    %s42 = sadd.s32 0, 0
    %s43 = sadd.s32 0, 0
    %p44 = scmp.eq.s32.totalorder 0, 0
    // Predicated region
    $region18: #{tpu_custom_call.1} parent=1 // pred_check
      %p45 = pneg %p44
    $region19: #{tpu_custom_call.1} parent=1 // pred_check_branch
      %47 = sbr.rel (%p45) target = $region21
    $region20: #{tpu_custom_call.1} parent=1 // pred_region
      %48 = vst [vmem:[#allocation7] sm:$0xff] 0.0
    $region21: #{tpu_custom_call.1} parent=1 // pred_fallthru
      _
    %v49 = vld [vmem:[#allocation2] sm:$0xff]
    %v50 = vld [vmem:[#allocation5] sm:$0xff]
    %v51 = vlaneseq
    %v52 = vand.u32 %v51, 127
    %vm53 = vcmp.lt.s32.totalorder %v52, 3
    %v54 = vsub.f32 %v50, %v49
    %v55 = vand.u32 2147483647, %v54
    %v56 = vsub.f32 %v55, 6.2831855
    %v57 = vand.u32 2147483647, %v56
    %v58 = vmin.f32 %v55, %v57
    %v59 = vsel %vm53, 1, 0
    %vm60 = vcmp.eq.s32.totalorder %v59, 1
    %v61 = vsel %vm60, %v58, 0.0
    %vm62 = vcmask 39936
    %v63 = vsel %vm62, %v61, 0.0
    %64 = vadd.xlane.f32.xlu0 %v63
    %v65 = vpop.xlane.xlu0 %64
    %v66 = vmul.f32 %v65, 0.33333334
    %v67 = vmul.f32 %v54, %v54
    %v68 = vsel %vm60, 0.0, %v67
    %v69 = vsel %vm62, %v68, 0.0
    %70 = vadd.xlane.f32.xlu0 %v69
    %v71 = vpop.xlane.xlu0 %70
    %v72 = vrsqrt.pop %v71
    %v73 = vmul.f32 %v71, %v72
    %vm74 = vcmp.eq.f32.partialorder %v71, inf
    %v75 = vsel %vm74, %v71, %v73
    %vm76 = vcmp.eq.f32.partialorder %v71, 0.0
    %v77 = vand.u32 %v71, 2147483648
    %v78 = vsel %vm76, %v77, %v75
    %vm79 = vcmp.lt.f32.partialorder %v78, 5.0
    %v80 = vsel %vm79, 1, 0
    %v81 = vcvt.s32.f32 %v80
    %v82 = vrot.slane %v66, 4
    %v83 = vadd.f32 %v66, %v82
    %v84 = vrot.slane %v83, 2
    %v85 = vadd.f32 %v83, %v84
    %v86 = vrot.slane %v85, 1
    %v87 = vadd.f32 %v85, %v86
    %v88 = vrot.slane %v78, 4
    %v89 = vadd.f32 %v78, %v88
    %v90 = vrot.slane %v89, 2
    %v91 = vadd.f32 %v89, %v90
    %v92 = vrot.slane %v91, 1
    %v93 = vadd.f32 %v91, %v92
    %v94 = vrot.slane %v81, 4
    %v95 = vadd.f32 %v81, %v94
    %v96 = vrot.slane %v95, 2
    %v97 = vadd.f32 %v95, %v96
    %v98 = vrot.slane %v97, 1
    %v99 = vadd.f32 %v97, %v98
    %vm100 = vcmp.eq.s32.totalorder %v52, 0
    %v101 = vsel %vm100, %v87, 0.0
    %vm102 = vcmp.eq.s32.totalorder %v52, 1
    %v103 = vsel %vm102, %v93, 0.0
    %v104 = vadd.f32 %v101, %v103
    %vm105 = vcmp.eq.s32.totalorder %v52, 2
    %v106 = vsel %vm105, %v99, 0.0
    %v107 = vadd.f32 %v104, %v106
    %v108 = vld [vmem:[#allocation7] sm:$0x1]
    %v109 = vadd.f32 %v108, %v107
    %110 = vst [vmem:[#allocation7] sm:$0x1] %v109
    // Predicated region
    $region22: #{tpu_custom_call.1} parent=1 // pred_check
      _
    $region23: #{tpu_custom_call.1} parent=1 // pred_check_branch
      %112 = sbr.rel (0) target = $region25
    $region24: #{tpu_custom_call.1} parent=1 // pred_region
      %s114 = ssub.s32 128, 128
      %115 = vsyncadd [#allocation4], %s114
      %s117 = sshll.u32 [#allocation7], 4
      %s118 = int_to_ptr.vmem [resolvable:$true] %s117
      %120 = dma.vmem_to_hbm [thread:$0]  %s118, 128, %s2, [#allocation4]
    $region25: #{tpu_custom_call.1} parent=1 // pred_fallthru
      _
    // Predicated region
    $region26: #{tpu_custom_call.1} parent=1 // pred_check
      _
    $region27: #{tpu_custom_call.1} parent=1 // pred_check_branch
      %122 = sbr.rel (0) target = $region29
    $region28: #{tpu_custom_call.1} parent=1 // pred_region
      %123 = dma.done [#allocation4], 128
    $region29: #{tpu_custom_call.1} parent=1 // pred_fallthru
      _
    %124 = vsyncpa [#allocation3], 1
    %125 = vsyncpa [#allocation6], 1
    %126 = vsyncpa [#allocation4], 1

</llo_original>
